<compile_context>
chip_gen: v7x
topology: tpu7x:2x2x1
jax: 0.10.0
libtpu: 0.0.40
codegen_flags: <defaults>
</compile_context>

<pallas_src>
import functools

import jax
import jax.numpy as jnp
from jax.experimental import pallas as pl
from jax.experimental.pallas import tpu as pltpu


_BIG = 1e30  # distance offset for padded codebook rows -> never win argmin


def _round_up(a, b):
    return (a + b - 1) // b * b


def _quantize_kernel(x_ref, cb_ref, cb_sq_ref, xd_ref, counts_ref, sse_ref,
                     *, bm, m_total):
    i = pl.program_id(0)

    x = x_ref[...]                       # (bm, D_pad)  f32
    cb = cb_ref[...]                     # (K_pad, D_pad) f32
    cb_sq = cb_sq_ref[...]               # (1, K_pad) f32 (+_BIG on padded codes)

    # distance = |x|^2 - 2 x.cb + |cb|^2 ; contraction over D expressed as an
    # NT matmul so the codebook is never transposed/copied in VMEM.
    x_sq = jnp.sum(x * x, axis=-1, keepdims=True)                       # (bm, 1)
    cross = jax.lax.dot_general(
        x, cb, dimension_numbers=(((1,), (1,)), ((), ())),
        preferred_element_type=jnp.float32)                             # (bm, K_pad)
    dist = x_sq - 2.0 * cross + cb_sq                                   # (bm, K_pad)

    # argmin with first-index tie-breaking (matches torch.min).
    k_pad = dist.shape[-1]
    min_d = jnp.min(dist, axis=-1, keepdims=True)                       # (bm, 1)
    iota_k = jax.lax.broadcasted_iota(jnp.int32, dist.shape, 1)         # (bm, K_pad)
    idx = jnp.min(jnp.where(dist == min_d, iota_k, k_pad), axis=-1,
                  keepdims=True)                                        # (bm, 1)

    # dequantize: one-hot gather as an MXU matmul.
    onehot = (iota_k == idx).astype(jnp.float32)                        # (bm, K_pad)
    x_d = jnp.dot(onehot, cb, preferred_element_type=jnp.float32)       # (bm, D_pad)
    xd_ref[...] = x_d

    # mask rows belonging to the padded remainder tile.
    row_id = i * bm + jax.lax.broadcasted_iota(jnp.int32, (bm, 1), 0)   # (bm, 1)
    valid = (row_id < m_total).astype(jnp.float32)                      # (bm, 1)

    # Per-block, lane-dense partials (no revisited output blocks -> the grid
    # axis stays "parallel"; reduction happens in the wrapper).
    counts_ref[...] = jnp.sum(onehot * valid, axis=0,
                              keepdims=True)[None, :, :]                # (1,1,K_pad)
    diff = (x - x_d) * valid
    sse_ref[...] = jnp.sum(diff * diff, axis=0,
                           keepdims=True)[None, :, :]                   # (1,1,D_pad)


def quantize_reset_forward(x, codebook, *, block_rows=512):
    """Eval-mode forward of QuantizeReset.

    Args:
      x:        (N, code_dim, T) float32
      codebook: (nb_code, code_dim) float32
      block_rows: target row-tile size (rounded to a multiple of 8).
    Returns:
      x_d:         (N, code_dim, T) float32 (straight-through forward value)
      commit_loss: scalar float32
      perplexity:  scalar float32
    """
    N, C, T = x.shape
    K, D = codebook.shape
    assert C == D
    M = N * T

    # preprocess: (N, C, T) -> (N, T, C) -> (M, C)
    # TODO(synk): consuming x in native (N, C, T) layout inside the kernel
    # would remove this extra HBM pass; kept in the wrapper for clarity.
    xf = jnp.transpose(x, (0, 2, 1)).reshape(M, C).astype(jnp.float32)
    cb = codebook.astype(jnp.float32)

    # Row tile (multiple of 8) and lane-dense padding of D / K to 128.
    bm = max(8, min(_round_up(block_rows, 8), _round_up(M, 8)))
    M_pad = _round_up(M, bm)
    D_pad = _round_up(D, 128)
    K_pad = _round_up(K, 128)
    G = M_pad // bm

    xf_p = jnp.zeros((M_pad, D_pad), jnp.float32).at[:M, :D].set(xf)
    cb_p = jnp.zeros((K_pad, D_pad), jnp.float32).at[:K, :D].set(cb)
    cb_sq = jnp.sum(cb_p * cb_p, axis=-1)                               # (K_pad,)
    cb_sq_p = jnp.where(jnp.arange(K_pad) < K, cb_sq, _BIG).reshape(1, K_pad)

    kernel = functools.partial(_quantize_kernel, bm=bm, m_total=M)

    xd_p, counts_part, sse_part = pl.pallas_call(
        kernel,
        out_shape=(
            jax.ShapeDtypeStruct((M_pad, D_pad), jnp.float32),
            jax.ShapeDtypeStruct((G, 1, K_pad), jnp.float32),
            jax.ShapeDtypeStruct((G, 1, D_pad), jnp.float32),
        ),
        grid_spec=pltpu.PrefetchScalarGridSpec(
            num_scalar_prefetch=0,
            grid=(G,),
            in_specs=[
                pl.BlockSpec((bm, D_pad), lambda i: (i, 0)),       # x rows (pipelined)
                pl.BlockSpec((K_pad, D_pad), lambda i: (0, 0)),    # codebook (resident)
                pl.BlockSpec((1, K_pad), lambda i: (0, 0)),        # |cb|^2
            ],
            out_specs=(
                pl.BlockSpec((bm, D_pad), lambda i: (i, 0)),       # x_d rows
                pl.BlockSpec((1, 1, K_pad), lambda i: (i, 0, 0)),  # per-block counts
                pl.BlockSpec((1, 1, D_pad), lambda i: (i, 0, 0)),  # per-block sse
            ),
        ),
        compiler_params=pltpu.CompilerParams(
            dimension_semantics=("parallel",),
            vmem_limit_bytes=32 * 1024 * 1024),
    )(xf_p, cb_p, cb_sq_p)

    # Reduce the tiny partials in plain JAX.
    counts = jnp.sum(counts_part, axis=(0, 1))[:K]                      # (K,)
    sse = jnp.sum(sse_part)
    commit_loss = sse / (M * D)
    prob = counts / jnp.sum(counts)
    perplexity = jnp.exp(-jnp.sum(prob * jnp.log(prob + 1e-7)))

    # straight-through: forward value of x + (x_d - x).detach() is x_d.
    x_out = xd_p[:M, :D].reshape(N, T, D).transpose(0, 2, 1)            # (N, C, T)
    return x_out, commit_loss, perplexity


def _reference(x, codebook):
    """Pure-JAX reference of the eval forward path."""
    N, C, T = x.shape
    K, D = codebook.shape
    xf = jnp.transpose(x, (0, 2, 1)).reshape(-1, C).astype(jnp.float32)
    dist = (jnp.sum(xf * xf, axis=-1, keepdims=True)
            - 2.0 * xf @ codebook.T
            + jnp.sum(codebook * codebook, axis=-1))
    idx = jnp.argmin(dist, axis=-1)
    x_d = codebook[idx]
    commit = jnp.mean((xf - x_d) ** 2)
    counts = jnp.sum(jax.nn.one_hot(idx, K, dtype=jnp.float32), axis=0)
    prob = counts / jnp.sum(counts)
    perp = jnp.exp(-jnp.sum(prob * jnp.log(prob + 1e-7)))
    x_out = x_d.reshape(N, T, D).transpose(0, 2, 1)
    return x_out, commit, perp


if __name__ == "__main__":
    key = jax.random.PRNGKey(0)
    k_cb, k_x = jax.random.split(key)

    nb_code, code_dim = 64, 32
    N, T = 2, 7  # M = 14 -> exercises the remainder/row-masking path with bm=8

    codebook = jax.random.normal(k_cb, (nb_code, code_dim), dtype=jnp.float32)
    x = jax.random.normal(k_x, (N, code_dim, T), dtype=jnp.float32)

    x_d, commit_loss, perplexity = quantize_reset_forward(
        x, codebook, block_rows=8)
    jax.block_until_ready((x_d, commit_loss, perplexity))

    x_d_ref, cl_ref, p_ref = _reference(x, codebook)
    assert x_d.shape == (N, code_dim, T)
    assert bool(jnp.allclose(x_d, x_d_ref, atol=1e-3, rtol=1e-3))
    assert bool(jnp.allclose(commit_loss, cl_ref, atol=1e-4, rtol=1e-3))
    assert bool(jnp.allclose(perplexity, p_ref, atol=1e-3, rtol=1e-3))
    assert bool(jnp.isfinite(commit_loss)) and bool(jnp.isfinite(perplexity))
    print("KERNEL_OK")
</pallas_src>

<mosaic_0001>
module attributes {stable_mosaic.version = 11 : i64} {
  func.func @_quantize_kernel(%arg0: i32, %arg1: memref<8x128xf32, #tpu.memory_space<vmem>>, %arg2: memref<128x128xf32, #tpu.memory_space<vmem>>, %arg3: memref<1x128xf32, #tpu.memory_space<vmem>>, %arg4: memref<8x128xf32, #tpu.memory_space<vmem>>, %arg5: memref<1x1x128xf32, #tpu.memory_space<vmem>>, %arg6: memref<1x1x128xf32, #tpu.memory_space<vmem>>) attributes {dimension_semantics = [#tpu.dimension_semantics<parallel>], iteration_bounds = array<i64: 2>, scalar_prefetch = 0 : i64, scratch_operands = 0 : i64, tpu.core_type = #tpu.core_type<tc>, window_params = [{transform_indices = @transform_0, window_bounds = array<i64: 8, 128>}, {pipeline_mode = #tpu.pipeline_mode<synchronous>, transform_indices = @transform_1, window_bounds = array<i64: 128, 128>}, {pipeline_mode = #tpu.pipeline_mode<synchronous>, transform_indices = @transform_2, window_bounds = array<i64: 1, 128>}, {transform_indices = @transform_3, window_bounds = array<i64: 8, 128>}, {transform_indices = @transform_4, window_bounds = array<i64: 1, 1, 128>}, {transform_indices = @transform_5, window_bounds = array<i64: 1, 1, 128>}]} {
    %c0 = arith.constant 0 : index
    %c0_0 = arith.constant 0 : index
    %0 = vector.load %arg1[%c0, %c0_0] : memref<8x128xf32, #tpu.memory_space<vmem>>, vector<8x128xf32>
    %c0_1 = arith.constant 0 : index
    %c0_2 = arith.constant 0 : index
    %1 = vector.load %arg2[%c0_1, %c0_2] : memref<128x128xf32, #tpu.memory_space<vmem>>, vector<128x128xf32>
    %c0_3 = arith.constant 0 : index
    %c0_4 = arith.constant 0 : index
    %2 = vector.load %arg3[%c0_3, %c0_4] : memref<1x128xf32, #tpu.memory_space<vmem>>, vector<1x128xf32>
    %3 = arith.mulf %0, %0 : vector<8x128xf32>
    %cst = arith.constant dense<0.000000e+00> : vector<8xf32>
    %4 = vector.multi_reduction <add>, %3, %cst [1] : vector<8x128xf32> to vector<8xf32>
    %5 = vector.shape_cast %4 : vector<8xf32> to vector<8x1xf32>
    %cst_5 = arith.constant dense<0.000000e+00> : vector<8x128xf32>
    %6 = tpu.matmul %0, %1, %cst_5 {dimension_numbers = #tpu.dot_dimension_numbers<[1], [1], [0], [0], [0, 0, 1, 0], [], []>} : vector<8x128xf32>, vector<128x128xf32>, vector<8x128xf32> -> vector<8x128xf32>
    %cst_6 = arith.constant 2.000000e+00 : f32
    %7 = vector.broadcast %cst_6 : f32 to vector<8x128xf32>
    %8 = arith.mulf %7, %6 : vector<8x128xf32>
    %9 = vector.broadcast %5 : vector<8x1xf32> to vector<8x128xf32>
    %10 = arith.subf %9, %8 : vector<8x128xf32>
    %11 = vector.broadcast %2 : vector<1x128xf32> to vector<8x128xf32>
    %12 = arith.addf %10, %11 : vector<8x128xf32>
    %cst_7 = arith.constant dense<0x7F800000> : vector<8xf32>
    %13 = vector.multi_reduction <minimumf>, %12, %cst_7 [1] : vector<8x128xf32> to vector<8xf32>
    %14 = vector.shape_cast %13 : vector<8xf32> to vector<8x1xf32>
    %15 = tpu.iota {dimensions = array<i32: 1>} : vector<8x128xi32>
    %16 = vector.broadcast %14 : vector<8x1xf32> to vector<8x128xf32>
    %17 = arith.cmpf oeq, %12, %16 : vector<8x128xf32>
    %c128_i32 = arith.constant 128 : i32
    %18 = vector.broadcast %c128_i32 : i32 to vector<8x128xi32>
    %19 = arith.select %17, %15, %18 : vector<8x128xi1>, vector<8x128xi32>
    %cst_8 = arith.constant dense<2147483647> : vector<8xi32>
    %20 = vector.multi_reduction <minsi>, %19, %cst_8 [1] : vector<8x128xi32> to vector<8xi32>
    %21 = vector.shape_cast %20 : vector<8xi32> to vector<8x1xi32>
    %22 = vector.broadcast %21 : vector<8x1xi32> to vector<8x128xi32>
    %23 = arith.cmpi eq, %15, %22 : vector<8x128xi32>
    %24 = arith.extui %23 : vector<8x128xi1> to vector<8x128xi32>
    %25 = arith.sitofp %24 : vector<8x128xi32> to vector<8x128xf32>
    %cst_9 = arith.constant dense<0.000000e+00> : vector<8x128xf32>
    %26 = tpu.matmul %25, %1, %cst_9 {dimension_numbers = #tpu.dot_dimension_numbers<[1], [0], [0], [1], [0, 0, 1, 1], [], []>} : vector<8x128xf32>, vector<128x128xf32>, vector<8x128xf32> -> vector<8x128xf32>
    %c0_10 = arith.constant 0 : index
    %c0_11 = arith.constant 0 : index
    %27 = vector.load %arg4[%c0_10, %c0_11] : memref<8x128xf32, #tpu.memory_space<vmem>>, vector<8x128xf32>
    tpu.vector_store %arg4[%c0_10, %c0_11], %26 {strides = array<i32>} : memref<8x128xf32, #tpu.memory_space<vmem>>, vector<8x128xf32>,
    %c8_i32 = arith.constant 8 : i32
    %28 = arith.muli %arg0, %c8_i32 : i32
    %29 = tpu.iota {dimensions = array<i32: 0>} : vector<8x1xi32>
    %30 = vector.broadcast %28 : i32 to vector<8x1xi32>
    %31 = arith.addi %30, %29 : vector<8x1xi32>
    %c14_i32 = arith.constant 14 : i32
    %32 = vector.broadcast %c14_i32 : i32 to vector<8x1xi32>
    %33 = arith.cmpi slt, %31, %32 : vector<8x1xi32>
    %34 = arith.extui %33 : vector<8x1xi1> to vector<8x1xi32>
    %35 = arith.sitofp %34 : vector<8x1xi32> to vector<8x1xf32>
    %36 = vector.broadcast %35 : vector<8x1xf32> to vector<8x128xf32>
    %37 = arith.mulf %25, %36 : vector<8x128xf32>
    %cst_12 = arith.constant dense<0.000000e+00> : vector<128xf32>
    %38 = vector.multi_reduction <add>, %37, %cst_12 [0] : vector<8x128xf32> to vector<128xf32>
    %39 = vector.shape_cast %38 : vector<128xf32> to vector<1x128xf32>
    %40 = vector.shape_cast %39 : vector<1x128xf32> to vector<1x1x128xf32>
    %c0_13 = arith.constant 0 : index
    %c0_14 = arith.constant 0 : index
    %c0_15 = arith.constant 0 : index
    %41 = vector.load %arg5[%c0_13, %c0_14, %c0_15] : memref<1x1x128xf32, #tpu.memory_space<vmem>>, vector<1x1x128xf32>
    tpu.vector_store %arg5[%c0_13, %c0_14, %c0_15], %40 {strides = array<i32>} : memref<1x1x128xf32, #tpu.memory_space<vmem>>, vector<1x1x128xf32>,
    %42 = arith.subf %0, %26 : vector<8x128xf32>
    %43 = vector.broadcast %35 : vector<8x1xf32> to vector<8x128xf32>
    %44 = arith.mulf %42, %43 : vector<8x128xf32>
    %45 = arith.mulf %44, %44 : vector<8x128xf32>
    %cst_16 = arith.constant dense<0.000000e+00> : vector<128xf32>
    %46 = vector.multi_reduction <add>, %45, %cst_16 [0] : vector<8x128xf32> to vector<128xf32>
    %47 = vector.shape_cast %46 : vector<128xf32> to vector<1x128xf32>
    %48 = vector.shape_cast %47 : vector<1x128xf32> to vector<1x1x128xf32>
    %c0_17 = arith.constant 0 : index
    %c0_18 = arith.constant 0 : index
    %c0_19 = arith.constant 0 : index
    %49 = vector.load %arg6[%c0_17, %c0_18, %c0_19] : memref<1x1x128xf32, #tpu.memory_space<vmem>>, vector<1x1x128xf32>
    tpu.vector_store %arg6[%c0_17, %c0_18, %c0_19], %48 {strides = array<i32>} : memref<1x1x128xf32, #tpu.memory_space<vmem>>, vector<1x1x128xf32>,
    return
  }
  func.func @transform_0(%arg0: i32) -> (i32, i32) {
    %c0_i32 = arith.constant 0 : i32
    %c0_i32_0 = arith.constant 0 : i32
    return %arg0, %c0_i32 : i32, i32
  }
  func.func @transform_1(%arg0: i32) -> (i32, i32) {
    %c0_i32 = arith.constant 0 : i32
    %c0_i32_0 = arith.constant 0 : i32
    %c0_i32_1 = arith.constant 0 : i32
    return %c0_i32, %c0_i32_0 : i32, i32
  }
  func.func @transform_2(%arg0: i32) -> (i32, i32) {
    %c0_i32 = arith.constant 0 : i32
    %c0_i32_0 = arith.constant 0 : i32
    %c0_i32_1 = arith.constant 0 : i32
    return %c0_i32, %c0_i32_0 : i32, i32
  }
  func.func @transform_3(%arg0: i32) -> (i32, i32) {
    %c0_i32 = arith.constant 0 : i32
    %c0_i32_0 = arith.constant 0 : i32
    return %arg0, %c0_i32 : i32, i32
  }
  func.func @transform_4(%arg0: i32) -> (i32, i32, i32) {
    %c0_i32 = arith.constant 0 : i32
    %c0_i32_0 = arith.constant 0 : i32
    %c0_i32_1 = arith.constant 0 : i32
    return %arg0, %c0_i32, %c0_i32_0 : i32, i32, i32
  }
  func.func @transform_5(%arg0: i32) -> (i32, i32, i32) {
    %c0_i32 = arith.constant 0 : i32
    %c0_i32_0 = arith.constant 0 : i32
    %c0_i32_1 = arith.constant 0 : i32
    return %arg0, %c0_i32, %c0_i32_0 : i32, i32, i32
  }
}

</mosaic_0001>

<llo_original>
// kernel: tpu_custom_call.1
$region0: #{tpu_custom_call.1}
  #allocation0 [shape = 'u32[]', space=smem, size = 0x4, offset = 0x4, fixed_abs, tag = 'smem constant byte address 0x4 - core index']
  #allocation1 [shape = 'u32[144,128]{1,0:T(1,128)}', space=vmem, size = 0x12000, scoped, tag = 'internal scratch']
  %s0 = inlined_call_operand.hbm [shape: f32[16,128], index: 0, kind: input, shape index: {}]
  %s1 = inlined_call_operand.hbm [shape: f32[128,128], index: 1, kind: input, shape index: {}]
  %s2 = inlined_call_operand.vmem [shape: f32[1,128], index: 2, kind: input, shape index: {}]
  %s3 = inlined_call_operand.hbm [shape: f32[16,128], index: 3, kind: output, shape index: {0}]
  %s4 = inlined_call_operand.hbm [shape: f32[2,1,128], index: 4, kind: output, shape index: {1}]
  %s5 = inlined_call_operand.hbm [shape: f32[2,1,128], index: 5, kind: output, shape index: {2}]
  %6 = xla_tuple %s3, %s4, %s5
  %s7 = sld [smem:[#allocation0]]
  $region69: #{tpu_custom_call.1} parent=0
    _
  %s9 = ssub.s32 1, %s7
  %s10 = scalar_select 0, %s9, %s7
  $region1: #{tpu_custom_call.1} parent=0
    #allocation2 [shape = 'u8[8192]{0}', space=vmem, size = 0x2000, scoped, tag = 'input window, operand 0']
    #allocation3 [shape = 's32[2]{0}', space=sflag, size = 0x8, scoped, tag = 'scoped memory for tpu_custom_call.1']
    #allocation4 [shape = 's32[2]{0}', space=sflag, size = 0x8, scoped, tag = 'scoped memory for tpu_custom_call.1']
    #allocation5 [shape = 'u8[65536]{0}', space=vmem, size = 0x10000, scoped, tag = 'input window, operand 1, single buffered']
    #allocation6 [shape = 's32[1]{0}', space=sflag, size = 0x4, scoped, tag = 'scoped memory for tpu_custom_call.1']
    #allocation7 [shape = 'u8[8192]{0}', space=vmem, size = 0x2000, scoped, tag = 'output window, operand 0']
    #allocation8 [shape = 'u8[1024]{0}', space=vmem, size = 0x400, scoped, tag = 'output window, operand 1']
    #allocation9 [shape = 's32[2]{0}', space=sflag, size = 0x8, scoped, tag = 'scoped memory for tpu_custom_call.1']
    #allocation10 [shape = 'u8[1024]{0}', space=vmem, size = 0x400, scoped, tag = 'output window, operand 2']
    %11 = vsyncpa [#allocation3], 0
    %s12 = scalar_lea.sflag [#allocation3], 1
    %13 = vsyncpa %s12, 0
    %14 = vsyncpa [#allocation6], 0
    %15 = vsyncpa [#allocation4], 0
    %s16 = scalar_lea.sflag [#allocation4], 1
    %17 = vsyncpa %s16, 0
    %18 = vsyncpa [#allocation9], 0
    %s19 = scalar_lea.sflag [#allocation9], 1
    %20 = vsyncpa %s19, 0
    loop: start=0, step=1, limit=4
    $region2: #{tpu_custom_call.1} parent=1 // loop_pre_header
      _
    $region3: #{tpu_custom_call.1} parent=1 // loop_header
      %s22 = sphi 0, %s26
      %p23 = scmp.ge.s32.totalorder %s22, 4
      %s32 = sphi 0, %s34
      %s35 = sphi 0, %s32
      %s36 = sphi 0, %s35
      %s52 = sphi 0, %s36
      %s56 = sphi 0, %s56
      %s58 = sphi 0, %s56
      %s59 = sphi 0, %s58
      %s73 = sphi 0, %s59
      %s77 = sphi 0, %s77
      %s79 = sphi 0, %s77
      %s80 = sphi 0, %s79
      %s94 = sphi 0, %s80
      %s100 = sphi 0, %s102
      %s103 = sphi 0, %s100
      %s104 = sphi 0, %s103
      %s120 = sphi 0, %s104
      %s126 = sphi 0, %s128
      %s129 = sphi 0, %s126
      %s130 = sphi 0, %s129
      %s146 = sphi 0, %s130
      %s152 = sphi 0, %s154
      %s155 = sphi 0, %s152
      %s156 = sphi 0, %s155
      %s172 = sphi 0, %s156
    $region4: #{tpu_custom_call.1} parent=1 // loop_header_branch
      %25 = sbr.rel (%p23) target = $region8
    $region5: #{tpu_custom_call.1} parent=1 // loop_body
      %s27 = ssub.s32 %s22, 1
      %s28 = ssub.s32 %s22, 2
      %s29 = sadd.s32 %s22, 1
      %s30 = ssub.s32 %s22, %s29
      %p31 = scmp.eq.s32.totalorder %s30, 0
      %s33 = sadd.s32 %s32, 1
      %s34 = scalar_select %p31, %s32, %s33
      %p37 = pneg %p31
      %p38 = scmp.eq.s32.totalorder %s22, 1
      %p39 = por %p37, %p38
      %p40 = scmp.ne.s32.totalorder %s32, %s35
      %p41 = scmp.eq.s32.totalorder %s22, 0
      %p42 = por %p40, %p41
      %p43 = scmp.ne.s32.totalorder %s32, %s35
      %p44 = scmp.eq.s32.totalorder %s27, 1
      %p45 = por %p43, %p44
      %p46 = scmp.ne.s32.totalorder %s35, %s36
      %p47 = scmp.eq.s32.totalorder %s27, 0
      %p48 = por %p46, %p47
      %p49 = scmp.ne.s32.totalorder %s35, %s36
      %p50 = scmp.eq.s32.totalorder %s28, 1
      %p51 = por %p49, %p50
      %p53 = scmp.ne.s32.totalorder %s36, %s52
      %p54 = scmp.eq.s32.totalorder %s28, 0
      %p55 = por %p53, %p54
      %s57 = sadd.s32 %s56, 1
      %p60 = scmp.eq.s32.totalorder %s22, 1
      %p61 = scmp.ne.s32.totalorder %s56, %s58
      %p62 = scmp.eq.s32.totalorder %s22, 0
      %p63 = por %p61, %p62
      %p64 = scmp.ne.s32.totalorder %s56, %s58
      %p65 = scmp.eq.s32.totalorder %s27, 1
      %p66 = por %p64, %p65
      %p67 = scmp.ne.s32.totalorder %s58, %s59
      %p68 = scmp.eq.s32.totalorder %s27, 0
      %p69 = por %p67, %p68
      %p70 = scmp.ne.s32.totalorder %s58, %s59
      %p71 = scmp.eq.s32.totalorder %s28, 1
      %p72 = por %p70, %p71
      %p74 = scmp.ne.s32.totalorder %s59, %s73
      %p75 = scmp.eq.s32.totalorder %s28, 0
      %p76 = por %p74, %p75
      %s78 = sadd.s32 %s77, 1
      %p81 = scmp.eq.s32.totalorder %s22, 1
      %p82 = scmp.ne.s32.totalorder %s77, %s79
      %p83 = scmp.eq.s32.totalorder %s22, 0
      %p84 = por %p82, %p83
      %p85 = scmp.ne.s32.totalorder %s77, %s79
      %p86 = scmp.eq.s32.totalorder %s27, 1
      %p87 = por %p85, %p86
      %p88 = scmp.ne.s32.totalorder %s79, %s80
      %p89 = scmp.eq.s32.totalorder %s27, 0
      %p90 = por %p88, %p89
      %p91 = scmp.ne.s32.totalorder %s79, %s80
      %p92 = scmp.eq.s32.totalorder %s28, 1
      %p93 = por %p91, %p92
      %p95 = scmp.ne.s32.totalorder %s80, %s94
      %p96 = scmp.eq.s32.totalorder %s28, 0
      %p97 = por %p95, %p96
      %s98 = ssub.s32 %s22, %s29
      %p99 = scmp.eq.s32.totalorder %s98, 0
      %s101 = sadd.s32 %s100, 1
      %s102 = scalar_select %p99, %s100, %s101
      %p105 = pneg %p99
      %p106 = scmp.eq.s32.totalorder %s22, 1
      %p107 = por %p105, %p106
      %p108 = scmp.ne.s32.totalorder %s100, %s103
      %p109 = scmp.eq.s32.totalorder %s22, 0
      %p110 = por %p108, %p109
      %p111 = scmp.ne.s32.totalorder %s100, %s103
      %p112 = scmp.eq.s32.totalorder %s27, 1
      %p113 = por %p111, %p112
      %p114 = scmp.ne.s32.totalorder %s103, %s104
      %p115 = scmp.eq.s32.totalorder %s27, 0
      %p116 = por %p114, %p115
      %p117 = scmp.ne.s32.totalorder %s103, %s104
      %p118 = scmp.eq.s32.totalorder %s28, 1
      %p119 = por %p117, %p118
      %p121 = scmp.ne.s32.totalorder %s104, %s120
      %p122 = scmp.eq.s32.totalorder %s28, 0
      %p123 = por %p121, %p122
      %s124 = ssub.s32 %s22, %s29
      %p125 = scmp.eq.s32.totalorder %s124, 0
      %s127 = sadd.s32 %s126, 1
      %s128 = scalar_select %p125, %s126, %s127
      %p131 = pneg %p125
      %p132 = scmp.eq.s32.totalorder %s22, 1
      %p133 = por %p131, %p132
      %p134 = scmp.ne.s32.totalorder %s126, %s129
      %p135 = scmp.eq.s32.totalorder %s22, 0
      %p136 = por %p134, %p135
      %p137 = scmp.ne.s32.totalorder %s126, %s129
      %p138 = scmp.eq.s32.totalorder %s27, 1
      %p139 = por %p137, %p138
      %p140 = scmp.ne.s32.totalorder %s129, %s130
      %p141 = scmp.eq.s32.totalorder %s27, 0
      %p142 = por %p140, %p141
      %p143 = scmp.ne.s32.totalorder %s129, %s130
      %p144 = scmp.eq.s32.totalorder %s28, 1
      %p145 = por %p143, %p144
      %p147 = scmp.ne.s32.totalorder %s130, %s146
      %p148 = scmp.eq.s32.totalorder %s28, 0
      %p149 = por %p147, %p148
      %s150 = ssub.s32 %s22, %s29
      %p151 = scmp.eq.s32.totalorder %s150, 0
      %s153 = sadd.s32 %s152, 1
      %s154 = scalar_select %p151, %s152, %s153
      %p157 = pneg %p151
      %p158 = scmp.eq.s32.totalorder %s22, 1
      %p159 = por %p157, %p158
      %p160 = scmp.ne.s32.totalorder %s152, %s155
      %p161 = scmp.eq.s32.totalorder %s22, 0
      %p162 = por %p160, %p161
      %p163 = scmp.ne.s32.totalorder %s152, %s155
      %p164 = scmp.eq.s32.totalorder %s27, 1
      %p165 = por %p163, %p164
      %p166 = scmp.ne.s32.totalorder %s155, %s156
      %p167 = scmp.eq.s32.totalorder %s27, 0
      %p168 = por %p166, %p167
      %p169 = scmp.ne.s32.totalorder %s155, %s156
      %p170 = scmp.eq.s32.totalorder %s28, 1
      %p171 = por %p169, %p170
      %p173 = scmp.ne.s32.totalorder %s156, %s172
      %p174 = scmp.eq.s32.totalorder %s28, 0
      %p175 = por %p173, %p174
      %p176 = scmp.le.s32.totalorder 1, %s22
      %p177 = scmp.lt.s32.totalorder %s22, 3
      %p178 = pnand %p176, %p177
      %p179 = pneg %p178
      // Predicated region
      $region9: #{tpu_custom_call.1} parent=5 // pred_check
        _
      $region10: #{tpu_custom_call.1} parent=5 // pred_check_branch
        %181 = sbr.rel (%p178) target = $region12
      $region11: #{tpu_custom_call.1} parent=5 // pred_region
        %s182 = ssub.s32 %s22, 1
        // Predicated region
        $region13: #{tpu_custom_call.1} parent=11 // pred_check
          %p183 = pneg %p69
        $region14: #{tpu_custom_call.1} parent=11 // pred_check_branch
          %185 = sbr.rel (%p183) target = $region16
        $region15: #{tpu_custom_call.1} parent=11 // pred_region
          %s187 = ssub.s32 2048, 2048
          %188 = vsyncadd [#allocation6], %s187
          %s189 = sshll.u32 [#allocation5], 4
          %s190 = int_to_ptr.vmem [resolvable:$true] %s189
          %195 = dma.hbm_to_vmem [thread:$0]  %s1, 2048, %s190, [#allocation6], 128, 128, 8
        $region16: #{tpu_custom_call.1} parent=11 // pred_fallthru
          _
        // Predicated region
        $region17: #{tpu_custom_call.1} parent=11 // pred_check
          %p196 = pneg %p90
        $region18: #{tpu_custom_call.1} parent=11 // pred_check_branch
          %198 = sbr.rel (%p196) target = $region20
        $region19: #{tpu_custom_call.1} parent=11 // pred_region
          _
        $region20: #{tpu_custom_call.1} parent=11 // pred_fallthru
          _
      $region12: #{tpu_custom_call.1} parent=5 // pred_fallthru
        _
      %p199 = scmp.lt.s32.totalorder %s22, 2
      // Predicated region
      $region21: #{tpu_custom_call.1} parent=5 // pred_check
        %p200 = pneg %p199
      $region22: #{tpu_custom_call.1} parent=5 // pred_check_branch
        %202 = sbr.rel (%p200) target = $region24
      $region23: #{tpu_custom_call.1} parent=5 // pred_region
        // Predicated region
        $region25: #{tpu_custom_call.1} parent=23 // pred_check
          %p203 = pneg %p42
        $region26: #{tpu_custom_call.1} parent=23 // pred_check_branch
          %205 = sbr.rel (%p203) target = $region28
        $region27: #{tpu_custom_call.1} parent=23 // pred_region
          %s206 = sand.u32 %s32, 1
          %s207 = scalar_lea.sflag [#allocation3], %s206
          %s208 = sand.u32 %s32, 1
          %s209 = smul.addr %s208, 8
          %s210 = scalar_lea.vmem [#allocation2], %s209
          %s212 = ssub.s32 128, 128
          %213 = vsyncadd %s207, %s212
          %s214 = smul.addr %s22, 128
          %s215 = scalar_lea.hbm %s0, %s214
          %s217 = sshll.u32 %s210, 4
          %s218 = int_to_ptr.vmem [resolvable:$true] %s217
          %220 = dma.hbm_to_vmem [thread:$0]  %s215, 128, %s218, %s207
        $region28: #{tpu_custom_call.1} parent=23 // pred_fallthru
          _
      $region24: #{tpu_custom_call.1} parent=5 // pred_fallthru
        _
      %p221 = scmp.le.s32.totalorder 1, %s22
      %p222 = scmp.lt.s32.totalorder %s22, 3
      %p223 = pnand %p221, %p222
      %p224 = pneg %p223
      // Predicated region
      $region29: #{tpu_custom_call.1} parent=5 // pred_check
        _
      $region30: #{tpu_custom_call.1} parent=5 // pred_check_branch
        %226 = sbr.rel (%p223) target = $region32
      $region31: #{tpu_custom_call.1} parent=5 // pred_region
        %s227 = ssub.s32 %s22, 1
        %s228 = sand.u32 %s35, 1
        %s229 = scalar_lea.sflag [#allocation3], %s228
        %s230 = sand.u32 %s35, 1
        %s231 = smul.addr %s230, 8
        %s232 = scalar_lea.vmem [#allocation2], %s231
        // Predicated region
        $region33: #{tpu_custom_call.1} parent=31 // pred_check
          %p233 = pneg %p48
        $region34: #{tpu_custom_call.1} parent=31 // pred_check_branch
          %235 = sbr.rel (%p233) target = $region36
        $region35: #{tpu_custom_call.1} parent=31 // pred_region
          %236 = dma.done %s229, 128
        $region36: #{tpu_custom_call.1} parent=31 // pred_fallthru
          _
        // Predicated region
        $region37: #{tpu_custom_call.1} parent=31 // pred_check
          %p237 = pneg %p69
        $region38: #{tpu_custom_call.1} parent=31 // pred_check_branch
          %239 = sbr.rel (%p237) target = $region40
        $region39: #{tpu_custom_call.1} parent=31 // pred_region
          %240 = dma.done [#allocation6], 2048
        $region40: #{tpu_custom_call.1} parent=31 // pred_fallthru
          _
        %s241 = sand.u32 %s35, 1
        %s242 = scalar_lea.sflag [#allocation3], %s241
        %s243 = sand.u32 %s35, 1
        %s244 = smul.addr %s243, 8
        %s245 = scalar_lea.vmem [#allocation2], %s244
        %p246 = pneg %p48
        %p247 = pneg %p45
        %p248 = pneg %p69
        %p249 = pneg %p66
        %p250 = pneg %p90
        %p251 = pneg %p87
        %p252 = pneg %p116
        %p253 = pneg %p113
        %s254 = sand.u32 %s103, 1
        %s255 = scalar_lea.sflag [#allocation4], %s254
        %s256 = sand.u32 %s103, 1
        %s257 = smul.addr %s256, 8
        %s258 = scalar_lea.vmem [#allocation7], %s257
        %p259 = pneg %p142
        %p260 = pneg %p139
        %s261 = sand.u32 %s27, 1
        %s262 = scalar_lea.sflag [#allocation9], %s261
        %s263 = sand.u32 %s129, 1
        %s264 = scalar_lea.vmem [#allocation8], %s263
        %p265 = pneg %p168
        %p266 = pneg %p165
        %s267 = sand.u32 %s27, 1
        %s268 = scalar_lea.sflag [#allocation9], %s267
        %s269 = sand.u32 %s155, 1
        %s270 = scalar_lea.vmem [#allocation10], %s269
        %v271 = vld [vmem:[%s232] sm:$0xff]
        %v272 = vld [vmem:[#allocation5] sm:$0xff]
        %v273 = vld [vmem:[#allocation5 + $0x8] sm:$0xff]
        %v274 = vld [vmem:[#allocation5 + $0x10] sm:$0xff]
        %v275 = vld [vmem:[#allocation5 + $0x18] sm:$0xff]
        %v276 = vld [vmem:[#allocation5 + $0x20] sm:$0xff]
        %v277 = vld [vmem:[#allocation5 + $0x28] sm:$0xff]
        %v278 = vld [vmem:[#allocation5 + $0x30] sm:$0xff]
        %v279 = vld [vmem:[#allocation5 + $0x38] sm:$0xff]
        %v280 = vld [vmem:[#allocation5 + $0x40] sm:$0xff]
        %v281 = vld [vmem:[#allocation5 + $0x48] sm:$0xff]
        %v282 = vld [vmem:[#allocation5 + $0x50] sm:$0xff]
        %v283 = vld [vmem:[#allocation5 + $0x58] sm:$0xff]
        %v284 = vld [vmem:[#allocation5 + $0x60] sm:$0xff]
        %v285 = vld [vmem:[#allocation5 + $0x68] sm:$0xff]
        %v286 = vld [vmem:[#allocation5 + $0x70] sm:$0xff]
        %v287 = vld [vmem:[#allocation5 + $0x78] sm:$0xff]
        %v288 = vld [vmem:[%s2] sm:$0x1]
        %v289 = vmul.f32 %v271, %v271
        %290 = vadd.xlane.f32.xlu0 %v289
        %v291 = vpop.xlane.xlu0 %290
        %292 = vmatprep.subr.mxu0 0.0
        %293 = vmatpush1.xpose.msra.mxu0 %v272
        %294 = vmatprep.subr.mxu0 0.0
        %295 = vmatpush1.xpose.msra.mxu0 %v273
        %296 = vmatprep.subr.mxu0 0.0
        %297 = vmatpush1.xpose.msra.mxu0 %v274
        %298 = vmatprep.subr.mxu0 0.0
        %299 = vmatpush1.xpose.msra.mxu0 %v275
        %300 = vmatprep.subr.mxu0 0.0
        %301 = vmatpush1.xpose.msra.mxu0 %v276
        %302 = vmatprep.subr.mxu0 0.0
        %303 = vmatpush1.xpose.msra.mxu0 %v277
        %304 = vmatprep.subr.mxu0 0.0
        %305 = vmatpush1.xpose.msra.mxu0 %v278
        %306 = vmatprep.subr.mxu0 0.0
        %307 = vmatpush1.xpose.msra.mxu0 %v279
        %308 = vmatprep.subr.mxu0 0.0
        %309 = vmatpush1.xpose.msra.mxu0 %v280
        %310 = vmatprep.subr.mxu0 0.0
        %311 = vmatpush1.xpose.msra.mxu0 %v281
        %312 = vmatprep.subr.mxu0 0.0
        %313 = vmatpush1.xpose.msra.mxu0 %v282
        %314 = vmatprep.subr.mxu0 0.0
        %315 = vmatpush1.xpose.msra.mxu0 %v283
        %316 = vmatprep.subr.mxu0 0.0
        %317 = vmatpush1.xpose.msra.mxu0 %v284
        %318 = vmatprep.subr.mxu0 0.0
        %319 = vmatpush1.xpose.msra.mxu0 %v285
        %320 = vmatprep.subr.mxu0 0.0
        %321 = vmatpush1.xpose.msra.mxu0 %v286
        %322 = vmatprep.subr.mxu0 0.0
        %323 = vmatpush1.xpose.msra.mxu0 %v287
        %324 = vmatprep.subr.mxu0 0.0
        %325 = vmatpush1.xpose.msra.mxu0 0.0
        %326 = vmatprep.subr.mxu0 0.0
        %327 = vmatpush1.xpose.msra.mxu0 0.0
        %328 = vmatprep.subr.mxu0 0.0
        %329 = vmatpush1.xpose.msra.mxu0 0.0
        %330 = vmatprep.subr.mxu0 0.0
        %331 = vmatpush1.xpose.msra.mxu0 0.0
        %332 = vmatprep.subr.mxu0 0.0
        %333 = vmatpush1.xpose.msra.mxu0 0.0
        %334 = vmatprep.subr.mxu0 0.0
        %335 = vmatpush1.xpose.msra.mxu0 0.0
        %336 = vmatprep.subr.mxu0 0.0
        %337 = vmatpush1.xpose.msra.mxu0 0.0
        %338 = vmatprep.subr.mxu0 0.0
        %339 = vmatpush1.xpose.msra.mxu0 0.0
        %340 = vmatprep.subr.mxu0 0.0
        %341 = vmatpush1.xpose.msra.mxu0 0.0
        %342 = vmatprep.subr.mxu0 0.0
        %343 = vmatpush1.xpose.msra.mxu0 0.0
        %344 = vmatprep.subr.mxu0 0.0
        %345 = vmatpush1.xpose.msra.mxu0 0.0
        %346 = vmatprep.subr.mxu0 0.0
        %347 = vmatpush1.xpose.msra.mxu0 0.0
        %348 = vmatprep.subr.mxu0 0.0
        %349 = vmatpush1.xpose.msra.mxu0 0.0
        %350 = vmatprep.subr.mxu0 0.0
        %351 = vmatpush1.xpose.msra.mxu0 0.0
        %352 = vmatprep.subr.mxu0 0.0
        %353 = vmatpush1.xpose.msra.mxu0 0.0
        %354 = vmatprep.subr.mxu0 0.0
        %355 = vmatpush1.xpose.msra.mxu0 0.0
        %356 = vmatprep.mubr.f32.mxu0 0.0
        %357 = vmatmul.mubr.f32.gmra.mrb[0].mxu0 %v271
        %v358 = vpop.f32.mrb[0].mxu0
        %v359 = vadd.f32 0.0, %v358
        %v360 = vpop.f32.mrb[0].mxu0
        %361 = vdwg.mxu0
        %v362 = vmul.f32 %v359, 2.0
        %v363 = vsub.f32 %v291, %v362
        %v365 = vlaneseq
        %v366 = vshrl.u32 %v365, 7
        %v367 = vsub.s32 0, %v366
        %v368 = vrot.slane %v288, %v367
        %v370 = vadd.f32 %v363, %v368
        %371 = vmin.xlane.f32.xlu0 %v370
        %v372 = vpop.xlane.xlu0 %371
        %v373 = vlaneseq
        %v374 = vand.u32 %v373, 127
        %vm375 = vcmp.eq.f32.partialorder %v370, %v372
        %v376 = vsel %vm375, %v374, 128
        %v377 = vand.u32 %v376, 65535
        %v378 = vshra.s32 %v376, 16
        %v379 = vcvt.s32.f32 %v377
        %v380 = vcvt.s32.f32 %v378
        %381 = vmin.xlane.f32.xlu0 %v380
        %v382 = vpop.xlane.xlu0 %381
        %vm383 = vcmp.eq.f32.partialorder %v380, %v382
        %v384 = vsel %vm383, %v379, inf
        %385 = vmin.xlane.f32.xlu0 %v384
        %v386 = vpop.xlane.xlu0 %385
        %v387 = vcvt.f32.s32 %v386
        %v388 = vcvt.f32.s32 %v382
        %v389 = vshll.u32 %v388, 16
        %v390 = vadd.s32 %v389, %v387
        %vm391 = vcmp.eq.s32.totalorder %v374, %v390
        %v392 = vsel %vm391, 1, 0
        %v393 = vcvt.s32.f32 %v392
        %394 = vmatprep.subr.mxu0 0.0
        %395 = vmatpush1.msra.mxu0 %v272
        %396 = vmatprep.subr.mxu0 0.0
        %397 = vmatpush1.msra.mxu0 %v273
        %398 = vmatprep.subr.mxu0 0.0
        %399 = vmatpush1.msra.mxu0 %v274
        %400 = vmatprep.subr.mxu0 0.0
        %401 = vmatpush1.msra.mxu0 %v275
        %402 = vmatprep.subr.mxu0 0.0
        %403 = vmatpush1.msra.mxu0 %v276
        %404 = vmatprep.subr.mxu0 0.0
        %405 = vmatpush1.msra.mxu0 %v277
        %406 = vmatprep.subr.mxu0 0.0
        %407 = vmatpush1.msra.mxu0 %v278
        %408 = vmatprep.subr.mxu0 0.0
        %409 = vmatpush1.msra.mxu0 %v279
        %410 = vmatprep.subr.mxu0 0.0
        %411 = vmatpush1.msra.mxu0 %v280
        %412 = vmatprep.subr.mxu0 0.0
        %413 = vmatpush1.msra.mxu0 %v281
        %414 = vmatprep.subr.mxu0 0.0
        %415 = vmatpush1.msra.mxu0 %v282
        %416 = vmatprep.subr.mxu0 0.0
        %417 = vmatpush1.msra.mxu0 %v283
        %418 = vmatprep.subr.mxu0 0.0
        %419 = vmatpush1.msra.mxu0 %v284
        %420 = vmatprep.subr.mxu0 0.0
        %421 = vmatpush1.msra.mxu0 %v285
        %422 = vmatprep.subr.mxu0 0.0
        %423 = vmatpush1.msra.mxu0 %v286
        %424 = vmatprep.subr.mxu0 0.0
        %425 = vmatpush1.msra.mxu0 %v287
        %426 = vmatprep.subr.mxu0 0.0
        %427 = vmatpush1.msra.mxu0 0.0
        %428 = vmatprep.subr.mxu0 0.0
        %429 = vmatpush1.msra.mxu0 0.0
        %430 = vmatprep.subr.mxu0 0.0
        %431 = vmatpush1.msra.mxu0 0.0
        %432 = vmatprep.subr.mxu0 0.0
        %433 = vmatpush1.msra.mxu0 0.0
        %434 = vmatprep.subr.mxu0 0.0
        %435 = vmatpush1.msra.mxu0 0.0
        %436 = vmatprep.subr.mxu0 0.0
        %437 = vmatpush1.msra.mxu0 0.0
        %438 = vmatprep.subr.mxu0 0.0
        %439 = vmatpush1.msra.mxu0 0.0
        %440 = vmatprep.subr.mxu0 0.0
        %441 = vmatpush1.msra.mxu0 0.0
        %442 = vmatprep.subr.mxu0 0.0
        %443 = vmatpush1.msra.mxu0 0.0
        %444 = vmatprep.subr.mxu0 0.0
        %445 = vmatpush1.msra.mxu0 0.0
        %446 = vmatprep.subr.mxu0 0.0
        %447 = vmatpush1.msra.mxu0 0.0
        %448 = vmatprep.subr.mxu0 0.0
        %449 = vmatpush1.msra.mxu0 0.0
        %450 = vmatprep.subr.mxu0 0.0
        %451 = vmatpush1.msra.mxu0 0.0
        %452 = vmatprep.subr.mxu0 0.0
        %453 = vmatpush1.msra.mxu0 0.0
        %454 = vmatprep.subr.mxu0 0.0
        %455 = vmatpush1.msra.mxu0 0.0
        %456 = vmatprep.subr.mxu0 0.0
        %457 = vmatpush1.msra.mxu0 0.0
        %458 = vmatprep.mubr.f32.mxu0 0.0
        %459 = vmatmul.mubr.f32.gmra.mrb[0].mxu0 %v393
        %v460 = vpop.f32.mrb[0].mxu0
        %v461 = vadd.f32 0.0, %v460
        %v462 = vpop.f32.mrb[0].mxu0
        %463 = vdwg.mxu0
        %464 = vst [vmem:[%s258] sm:$0xff] %v461
        %s465 = smul.u32 %s27, 8
        %v466 = vlaneseq
        %v467 = vshrl.u32 %v466, 7
        %v468 = vstv %s465
        %v469 = vadd.s32 %v468, %v467
        %vm470 = vcmp.lt.s32.totalorder %v469, 14
        %v471 = vsel %vm470, 1, 0
        %v472 = vcvt.s32.f32 %v471
        %v473 = vmul.f32 %v393, %v472
        %v474 = vrot.slane %v473, 4
        %v475 = vadd.f32 %v473, %v474
        %v476 = vrot.slane %v475, 2
        %v477 = vadd.f32 %v475, %v476
        %v478 = vrot.slane %v477, 1
        %v479 = vadd.f32 %v477, %v478
        %480 = vst [vmem:[%s264] sm:$0x1] %v479
        %v481 = vsub.f32 %v271, %v461
        %v482 = vmul.f32 %v481, %v472
        %v483 = vmul.f32 %v482, %v482
        %v484 = vrot.slane %v483, 4
        %v485 = vadd.f32 %v483, %v484
        %v486 = vrot.slane %v485, 2
        %v487 = vadd.f32 %v485, %v486
        %v488 = vrot.slane %v487, 1
        %v489 = vadd.f32 %v487, %v488
        %490 = vst [vmem:[%s270] sm:$0x1] %v489
        %s491 = sand.u32 %s103, 1
        %s492 = scalar_lea.sflag [#allocation4], %s491
        %s493 = sand.u32 %s103, 1
        %s494 = smul.addr %s493, 8
        %s495 = scalar_lea.vmem [#allocation7], %s494
        %s496 = sand.u32 %s27, 1
        %s497 = scalar_lea.sflag [#allocation9], %s496
        %s498 = sand.u32 %s129, 1
        %s499 = scalar_lea.vmem [#allocation8], %s498
        %s500 = sand.u32 %s27, 1
        %s501 = scalar_lea.sflag [#allocation9], %s500
        %s502 = sand.u32 %s155, 1
        %s503 = scalar_lea.vmem [#allocation10], %s502
        // Predicated region
        $region41: #{tpu_custom_call.1} parent=31 // pred_check
          %p504 = pneg %p113
        $region42: #{tpu_custom_call.1} parent=31 // pred_check_branch
          %506 = sbr.rel (%p504) target = $region44
        $region43: #{tpu_custom_call.1} parent=31 // pred_region
          %s508 = ssub.s32 128, 128
          %509 = vsyncadd %s492, %s508
          %s510 = smul.addr %s27, 128
          %s511 = scalar_lea.hbm %s3, %s510
          %s513 = sshll.u32 %s495, 4
          %s514 = int_to_ptr.vmem [resolvable:$true] %s513
          %516 = dma.vmem_to_hbm [thread:$0]  %s514, 128, %s511, %s492
        $region44: #{tpu_custom_call.1} parent=31 // pred_fallthru
          _
        // Predicated region
        $region45: #{tpu_custom_call.1} parent=31 // pred_check
          %p517 = pneg %p139
        $region46: #{tpu_custom_call.1} parent=31 // pred_check_branch
          %519 = sbr.rel (%p517) target = $region48
        $region47: #{tpu_custom_call.1} parent=31 // pred_region
          %s521 = ssub.s32 16, 16
          %522 = vsyncadd %s497, %s521
          %s523 = smul.addr %s27, 16
          %s524 = scalar_lea.hbm %s4, %s523
          %s526 = sshll.u32 %s499, 4
          %s527 = int_to_ptr.vmem [resolvable:$true] %s526
          %529 = dma.vmem_to_hbm [thread:$0]  %s527, 16, %s524, %s497
        $region48: #{tpu_custom_call.1} parent=31 // pred_fallthru
          _
        // Predicated region
        $region49: #{tpu_custom_call.1} parent=31 // pred_check
          %p530 = pneg %p165
        $region50: #{tpu_custom_call.1} parent=31 // pred_check_branch
          %532 = sbr.rel (%p530) target = $region52
        $region51: #{tpu_custom_call.1} parent=31 // pred_region
          %s534 = ssub.s32 16, 16
          %535 = vsyncadd %s501, %s534
          %s536 = smul.addr %s27, 16
          %s537 = scalar_lea.hbm %s5, %s536
          %s539 = sshll.u32 %s503, 4
          %s540 = int_to_ptr.vmem [resolvable:$true] %s539
          %542 = dma.vmem_to_hbm [thread:$0]  %s540, 16, %s537, %s501
        $region52: #{tpu_custom_call.1} parent=31 // pred_fallthru
          _
      $region32: #{tpu_custom_call.1} parent=5 // pred_fallthru
        _
      %p543 = scmp.le.s32.totalorder 2, %s22
      // Predicated region
      $region53: #{tpu_custom_call.1} parent=5 // pred_check
        %p544 = pneg %p543
      $region54: #{tpu_custom_call.1} parent=5 // pred_check_branch
        %546 = sbr.rel (%p544) target = $region56
      $region55: #{tpu_custom_call.1} parent=5 // pred_region
        %s547 = ssub.s32 %s22, 2
        // Predicated region
        $region57: #{tpu_custom_call.1} parent=55 // pred_check
          %p548 = pneg %p119
        $region58: #{tpu_custom_call.1} parent=55 // pred_check_branch
          %550 = sbr.rel (%p548) target = $region60
        $region59: #{tpu_custom_call.1} parent=55 // pred_region
          %s551 = sand.u32 %s104, 1
          %s552 = scalar_lea.sflag [#allocation4], %s551
          %s553 = sand.u32 %s104, 1
          %s554 = smul.addr %s553, 8
          %s555 = scalar_lea.vmem [#allocation7], %s554
          %556 = dma.done %s552, 128
        $region60: #{tpu_custom_call.1} parent=55 // pred_fallthru
          _
        // Predicated region
        $region61: #{tpu_custom_call.1} parent=55 // pred_check
          %p557 = pneg %p145
        $region62: #{tpu_custom_call.1} parent=55 // pred_check_branch
          %559 = sbr.rel (%p557) target = $region64
        $region63: #{tpu_custom_call.1} parent=55 // pred_region
          %s560 = sand.u32 %s28, 1
          %s561 = scalar_lea.sflag [#allocation9], %s560
          %s562 = sand.u32 %s130, 1
          %s563 = scalar_lea.vmem [#allocation8], %s562
          %564 = dma.done %s561, 16
        $region64: #{tpu_custom_call.1} parent=55 // pred_fallthru
          _
        // Predicated region
        $region65: #{tpu_custom_call.1} parent=55 // pred_check
          %p565 = pneg %p171
        $region66: #{tpu_custom_call.1} parent=55 // pred_check_branch
          %567 = sbr.rel (%p565) target = $region68
        $region67: #{tpu_custom_call.1} parent=55 // pred_region
          %s568 = sand.u32 %s28, 1
          %s569 = scalar_lea.sflag [#allocation9], %s568
          %s570 = sand.u32 %s156, 1
          %s571 = scalar_lea.vmem [#allocation10], %s570
          %572 = dma.done %s569, 16
        $region68: #{tpu_custom_call.1} parent=55 // pred_fallthru
          _
      $region56: #{tpu_custom_call.1} parent=5 // pred_fallthru
        _
    $region6: #{tpu_custom_call.1} parent=1 // loop_footer
      %s26 = sadd.s32 1, %s22
    $region7: #{tpu_custom_call.1} parent=1 // loop_footer_branch
      %21 = sbr.rel target = $region3
    $region8: #{tpu_custom_call.1} parent=1 // loop_exit
      _
    %573 = vsyncpa [#allocation3], 1
    %s574 = scalar_lea.sflag [#allocation3], 1
    %575 = vsyncpa %s574, 1
    %576 = vsyncpa [#allocation6], 1
    %577 = vsyncpa [#allocation4], 1
    %s578 = scalar_lea.sflag [#allocation4], 1
    %579 = vsyncpa %s578, 1
    %580 = vsyncpa [#allocation9], 1
    %s581 = scalar_lea.sflag [#allocation9], 1
    %582 = vsyncpa %s581, 1

</llo_original>
